<compile_context>
chip_gen: v5e
topology: v5e:2x2
jax: 0.10.0
libtpu: 0.0.40
codegen_flags: <defaults>
</compile_context>

<pallas_src>
import jax
import jax.numpy as jnp
from jax.experimental import pallas as pl
from jax.experimental.pallas import tpu as pltpu

EPS = 1e-5

# ---------------------------------------------------------------------------
# One-time hardware probe: pin pltpu.roll's rotation convention against
# jnp.roll so the in-kernel tap shifts are correct on any jax/libtpu version.
# ---------------------------------------------------------------------------
_ROLL_MATCHES_JNP = None


def _pltpu_roll_matches_jnp():
    global _ROLL_MATCHES_JNP
    if _ROLL_MATCHES_JNP is None:
        def probe_kernel(x_ref, o_ref):
            o_ref[...] = pltpu.roll(x_ref[...], 5, 1)

        x = jnp.arange(8 * 256, dtype=jnp.float32).reshape(8, 256)
        y = pl.pallas_call(
            probe_kernel,
            out_shape=jax.ShapeDtypeStruct((8, 256), jnp.float32),
        )(x)
        if bool(jnp.array_equal(y, jnp.roll(x, 5, axis=1))):
            _ROLL_MATCHES_JNP = True
        elif bool(jnp.array_equal(y, jnp.roll(x, -5, axis=1))):
            _ROLL_MATCHES_JNP = False
        else:
            raise RuntimeError("pltpu.roll produced an unexpected rotation")
    return _ROLL_MATCHES_JNP


# ---------------------------------------------------------------------------
# Fused kernel factory (all shape params and roll convention are static)
# ---------------------------------------------------------------------------
def _make_fused_kernel(B, H, Wd, Ci, Co, roll_matches_jnp):
    HW = H * Wd
    N = B * HW

    # Static roll shifts for the 9 conv taps (tap k = kh*3 + kw).
    shifts = []
    for k in range(9):
        kh, kw = divmod(k, 3)
        off = (kh - 1) * Wd + (kw - 1)
        shifts.append(((-off) % N) if roll_matches_jnp else (off % N))

    def kernel(x_ref, wpre_ref,
               ingb_w_ref, ingb_b_ref, inc_w_ref, inc_b_ref,
               osh_w_ref, osh_b_ref, ogb_w_ref, ogb_b_ref,
               oc_w_ref, oc_b_ref, sk_w_ref, sk_b_ref,
               out_ref, h2_ref):
        f32 = jnp.float32

        # Per-position row/col within each image (batch is stacked along lanes).
        idx = jax.lax.broadcasted_iota(jnp.int32, (1, N), 1)
        col = idx % Wd
        row = (idx // Wd) % H

        masks = []
        for k in range(9):
            kh, kw = divmod(k, 3)
            m = None
            if kh == 0:
                m = row >= 1
            elif kh == 2:
                m = row <= H - 2
            if kw == 0:
                m = (col >= 1) if m is None else jnp.logical_and(m, col >= 1)
            elif kw == 2:
                m = (col <= Wd - 2) if m is None else jnp.logical_and(m, col <= Wd - 2)
            masks.append(m)

        def silu(t):
            # Exact sigmoid kept (review correctness note on the 2e-3 gate);
            # approx EUP reciprocal left as a validated-later switch.
            return t * (1.0 / (1.0 + jnp.exp(-t)))

        def inorm(t):
            # Per-(channel-row, image) instance norm; images live in disjoint,
            # vreg-aligned lane segments of width HW.  One-pass variance, clamped.
            parts = []
            for b in range(B):
                tb = t[:, b * HW:(b + 1) * HW]
                mu = jnp.mean(tb, axis=-1, keepdims=True)
                var = jnp.maximum(
                    jnp.mean(tb * tb, axis=-1, keepdims=True) - mu * mu, 0.0)
                parts.append((tb - mu) * jax.lax.rsqrt(var + EPS))
            return jnp.concatenate(parts, axis=-1) if B > 1 else parts[0]

        def im2col(src):
            # src (Cs, N) -> (9*Cs, N), tap-major / channel-minor row order,
            # matching the wrapper's (Cout, 9*Cin) weight layout.
            taps = []
            for k in range(9):
                t = src if shifts[k] == 0 else pltpu.roll(src, shifts[k], 1)
                if masks[k] is not None:
                    t = jnp.where(masks[k], t, 0.0)
                taps.append(t)
            return jnp.concatenate(taps, axis=0)

        x = x_ref[...]                                   # (Ci, N)

        # ---- shared w branch: both AdaIN inputs normalized/SiLU'd in one pass ----
        wn = silu(inorm(wpre_ref[...]))                  # (2*Ci, N)
        wact = wn[:Ci]                                   # in_norm branch
        wact2 = wn[Ci:]                                  # out_norm branch (pre 1x1)

        # ---- in_norm (AdaIN, ch == w_ch): gamma & beta from ONE fused dot ----
        gb = jnp.dot(ingb_w_ref[...], im2col(wact),
                     preferred_element_type=f32) + ingb_b_ref[...]   # (2*Ci, N)
        gamma, beta = gb[:Ci], gb[Ci:]
        xn = inorm(x)
        h0 = silu(xn * (1.0 + gamma) + beta)             # in_layers SiLU fused

        # ---- in_layers 3x3 conv (Ci -> Co) ----
        h = jnp.dot(inc_w_ref[...], im2col(h0),
                    preferred_element_type=f32) + inc_b_ref[...]     # (Co, N)

        # ---- out_norm (AdaIN, ch != w_ch -> shared branch ends in a 1x1 conv) ----
        ws = jnp.dot(osh_w_ref[...], wact2,
                     preferred_element_type=f32) + osh_b_ref[...]    # (Co, N)
        gb2 = jnp.dot(ogb_w_ref[...], im2col(ws),
                      preferred_element_type=f32) + ogb_b_ref[...]   # (2*Co, N)
        gamma2, beta2 = gb2[:Co], gb2[Co:]
        hn = inorm(h)
        # TODO(synk): nn.Dropout(p=0.0) is the identity at inference; not modeled.
        h2 = silu(hn * (1.0 + gamma2) + beta2)           # out_layers SiLU
        h2_ref[...] = h2

        # ---- out_layers zero-conv 3x3 + 1x1 skip conv + residual, fused ----
        skip = jnp.dot(sk_w_ref[...], x,
                       preferred_element_type=f32) + sk_b_ref[...]
        out_ref[...] = skip + jnp.dot(oc_w_ref[...], im2col(h2),
                                      preferred_element_type=f32) + oc_b_ref[...]

    return kernel


# ---------------------------------------------------------------------------
# Wrapper: one-time layout prep (plain JAX) + a SINGLE no-grid pallas_call.
# ---------------------------------------------------------------------------
def adaptive_res_block(params, x, emb, w):
    B, Ci, H, Wd = x.shape
    Co = params['in_conv_w'].shape[0]
    HW = H * Wd
    N = B * HW
    f32 = jnp.float32

    # Channel-major, batch folded along lanes: (C, B*HW).
    def to_cm(t, C):
        return jnp.transpose(t.reshape(B, C, HW).astype(f32), (1, 0, 2)).reshape(C, N)

    x_cm = to_cm(x, Ci)
    w_cm = to_cm(w, Ci)

    # Tiny emb projections in plain JAX (avoid degenerate N=1 MXU ops in-kernel).
    e = jax.nn.silu(emb.astype(f32))
    proj_in = e @ params['in_lin_w'].T.astype(f32) + params['in_lin_b'].astype(f32)
    proj_out = e @ params['out_lin_w'].T.astype(f32) + params['out_lin_b'].astype(f32)

    def proj_cm(p):  # (B, Ci) -> (Ci, B*HW), constant over each image's lanes
        return jnp.repeat(p.T.astype(f32)[:, :, None], HW, axis=2).reshape(Ci, N)

    # Pre-stacked (w + proj_in ; w + proj_out): one inorm+SiLU pass in-kernel.
    wpre = jnp.concatenate([w_cm + proj_cm(proj_in), w_cm + proj_cm(proj_out)], axis=0)

    def taps(wgt):  # (Cout, Cin, 3, 3) -> (Cout, 9*Cin), column = (kh*3+kw)*Cin + ci
        co, ci = wgt.shape[0], wgt.shape[1]
        return jnp.transpose(wgt.astype(f32), (0, 2, 3, 1)).reshape(co, 9 * ci)

    def colb(b):
        return b.reshape(-1, 1).astype(f32)

    # gamma & beta fused along the output-channel axis (one dot per AdaIN).
    in_gb_w = jnp.concatenate([taps(params['in_gamma_w']), taps(params['in_beta_w'])], axis=0)
    in_gb_b = jnp.concatenate([colb(params['in_gamma_b']), colb(params['in_beta_b'])], axis=0)
    in_c_w, in_c_b = taps(params['in_conv_w']), colb(params['in_conv_b'])
    out_gb_w = jnp.concatenate([taps(params['out_gamma_w']), taps(params['out_beta_w'])], axis=0)
    out_gb_b = jnp.concatenate([colb(params['out_gamma_b']), colb(params['out_beta_b'])], axis=0)
    out_c_w, out_c_b = taps(params['out_conv_w']), colb(params['out_conv_b'])
    osh_w = params['out_shared_w'].reshape(Co, Ci).astype(f32)
    osh_b = colb(params['out_shared_b'])
    # NOTE: skip_connection modeled as the 1x1 conv branch (in_ch != out_ch case).
    sk_w = params['skip_w'].reshape(Co, Ci).astype(f32)
    sk_b = colb(params['skip_b'])

    kernel = _make_fused_kernel(B, H, Wd, Ci, Co, _pltpu_roll_matches_jnp())

    # No grid: single invocation, whole arrays VMEM-resident (default full-array
    # BlockSpecs); no pipelining / double-buffering of the constant weights.
    out_cm, h2_cm = pl.pallas_call(
        kernel,
        out_shape=(jax.ShapeDtypeStruct((Co, N), f32),
                   jax.ShapeDtypeStruct((Co, N), f32)),
        compiler_params=pltpu.CompilerParams(vmem_limit_bytes=32 * 1024 * 1024),
    )(x_cm, wpre,
      in_gb_w, in_gb_b, in_c_w, in_c_b,
      osh_w, osh_b, out_gb_w, out_gb_b,
      out_c_w, out_c_b, sk_w, sk_b)

    def from_cm(t, C):
        return jnp.transpose(t.reshape(C, B, HW), (1, 0, 2)).reshape(B, C, H, Wd)

    return from_cm(out_cm, Co), from_cm(h2_cm, Co)


# ---------------------------------------------------------------------------
# Deterministic parameter init (shapes follow the PyTorch __init__)
# ---------------------------------------------------------------------------
def init_params(key, in_ch, out_ch, emb_dim):
    shapes = {
        'in_lin_w': (in_ch, emb_dim), 'in_lin_b': (in_ch,),
        'in_beta_w': (in_ch, in_ch, 3, 3), 'in_beta_b': (in_ch,),
        'in_gamma_w': (in_ch, in_ch, 3, 3), 'in_gamma_b': (in_ch,),
        'in_conv_w': (out_ch, in_ch, 3, 3), 'in_conv_b': (out_ch,),
        'out_lin_w': (in_ch, emb_dim), 'out_lin_b': (in_ch,),
        'out_shared_w': (out_ch, in_ch, 1, 1), 'out_shared_b': (out_ch,),
        'out_beta_w': (out_ch, out_ch, 3, 3), 'out_beta_b': (out_ch,),
        'out_gamma_w': (out_ch, out_ch, 3, 3), 'out_gamma_b': (out_ch,),
        'skip_w': (out_ch, in_ch, 1, 1), 'skip_b': (out_ch,),
    }
    keys = jax.random.split(key, len(shapes))
    params = {n: 0.1 * jax.random.normal(k, s, jnp.float32)
              for (n, s), k in zip(shapes.items(), keys)}
    # out_layers final conv is zero_module()-initialized in the PyTorch module.
    params['out_conv_w'] = jnp.zeros((out_ch, out_ch, 3, 3), jnp.float32)
    params['out_conv_b'] = jnp.zeros((out_ch,), jnp.float32)
    return params


# ---------------------------------------------------------------------------
# Pure-JAX reference (mirrors the PyTorch forward) for correctness checking
# ---------------------------------------------------------------------------
def reference_forward(params, x, emb, w):
    def instnorm(t):
        mu = jnp.mean(t, axis=(2, 3), keepdims=True)
        var = jnp.mean((t - mu) ** 2, axis=(2, 3), keepdims=True)
        return (t - mu) * jax.lax.rsqrt(var + EPS)

    def silu(t):
        return t * jax.nn.sigmoid(t)

    def conv(t, wgt, b, pad):
        y = jax.lax.conv_general_dilated(
            t, wgt, (1, 1), pad, dimension_numbers=('NCHW', 'OIHW', 'NCHW'))
        return y + b[None, :, None, None]

    def adain(xx, ww, lin_w, lin_b, shared, beta_wb, gamma_wb):
        xn = instnorm(xx)
        proj = silu(emb) @ lin_w.T + lin_b
        w2 = ww + proj[:, :, None, None]
        wsh = silu(instnorm(w2))
        if shared is not None:
            wsh = conv(wsh, shared[0], shared[1], 'VALID')
        beta = conv(wsh, beta_wb[0], beta_wb[1], 'SAME')
        gamma = conv(wsh, gamma_wb[0], gamma_wb[1], 'SAME')
        return xn * (1.0 + gamma) + beta

    h0 = adain(x, w, params['in_lin_w'], params['in_lin_b'], None,
               (params['in_beta_w'], params['in_beta_b']),
               (params['in_gamma_w'], params['in_gamma_b']))
    h = conv(silu(h0), params['in_conv_w'], params['in_conv_b'], 'SAME')
    h1 = adain(h, w, params['out_lin_w'], params['out_lin_b'],
               (params['out_shared_w'], params['out_shared_b']),
               (params['out_beta_w'], params['out_beta_b']),
               (params['out_gamma_w'], params['out_gamma_b']))
    h2_act = silu(h1)
    h_final = conv(h2_act, params['out_conv_w'], params['out_conv_b'], 'SAME')
    sk = conv(x, params['skip_w'], params['skip_b'], 'VALID')
    return sk + h_final, h2_act


if __name__ == "__main__":
    B, in_ch, out_ch, emb_dim, H, W = 2, 4, 8, 32, 16, 16
    key = jax.random.PRNGKey(0)
    kx, ke, kw, kp = jax.random.split(key, 4)
    x = jax.random.normal(kx, (B, in_ch, H, W), jnp.float32)
    emb = jax.random.normal(ke, (B, emb_dim), jnp.float32)
    w = jax.random.normal(kw, (B, in_ch, H, W), jnp.float32)
    params = init_params(kp, in_ch, out_ch, emb_dim)

    out, h2 = adaptive_res_block(params, x, emb, w)
    out = jax.block_until_ready(out)

    ref_out, ref_h2 = reference_forward(params, x, emb, w)
    assert out.shape == (B, out_ch, H, W)
    assert jnp.allclose(out, ref_out, rtol=2e-3, atol=2e-3), "final output mismatch"
    assert jnp.allclose(h2, ref_h2, rtol=2e-3, atol=2e-3), "pre-zero-conv activation mismatch"
    print("KERNEL_OK")
</pallas_src>

<mosaic_0001>
module attributes {stable_mosaic.version = 11 : i64} {
  func.func @probe_kernel(%arg0: memref<8x256xf32, #tpu.memory_space<vmem>>, %arg1: memref<8x256xf32, #tpu.memory_space<vmem>>) attributes {dimension_semantics = [], scalar_prefetch = 0 : i64, scratch_operands = 0 : i64, tpu.core_type = #tpu.core_type<tc>} {
    %c0 = arith.constant 0 : index
    %c0_0 = arith.constant 0 : index
    %0 = vector.load %arg0[%c0, %c0_0] : memref<8x256xf32, #tpu.memory_space<vmem>>, vector<8x256xf32>
    %c5_i32 = arith.constant 5 : i32
    %1 = tpu.dynamic_rotate %0 by %c5_i32 dim 1 : vector<8x256xf32>, i32 -> vector<8x256xf32>
    %c0_1 = arith.constant 0 : index
    %c0_2 = arith.constant 0 : index
    %2 = vector.load %arg1[%c0_1, %c0_2] : memref<8x256xf32, #tpu.memory_space<vmem>>, vector<8x256xf32>
    tpu.vector_store %arg1[%c0_1, %c0_2], %1 {strides = array<i32>} : memref<8x256xf32, #tpu.memory_space<vmem>>, vector<8x256xf32>,
    return
  }
}

</mosaic_0001>

<llo_original>
// kernel: tpu_custom_call.1
$region0: #{tpu_custom_call.1}
  #allocation0 [shape = 'u32[]', space=smem, size = 0x4, offset = 0x4, fixed_abs, tag = 'smem constant byte address 0x4 - core index']
  #allocation1 [shape = 'u32[72,128]{1,0:T(1,128)}', space=vmem, size = 0x9000, scoped, tag = 'internal scratch']
  %s0 = inlined_call_operand.hbm [shape: f32[8,256], index: 0, kind: input, shape index: {}]
  %s1 = inlined_call_operand.hbm [shape: f32[8,256], index: 1, kind: output, shape index: {}]
  %s2 = sld [smem:[#allocation0]]
  $region18: #{tpu_custom_call.1} parent=0
    _
  %s4 = ssub.s32 1, %s2
  %s5 = scalar_select 0, %s4, %s2
  $region1: #{tpu_custom_call.1} parent=0
    #allocation2 [shape = 'u8[8192]{0}', space=vmem, size = 0x2000, scoped, tag = 'input window, operand 0, single buffered']
    #allocation3 [shape = 's32[1]{0}', space=sflag, size = 0x4, scoped, tag = 'scoped memory for tpu_custom_call.1']
    #allocation4 [shape = 's32[1]{0}', space=sflag, size = 0x4, scoped, tag = 'scoped memory for tpu_custom_call.1']
    #allocation5 [shape = 'u8[8192]{0}', space=vmem, size = 0x2000, scoped, tag = 'output window, operand 0, single buffered']
    %6 = vsyncpa [#allocation3], 0
    %7 = vsyncpa [#allocation4], 0
    // Predicated region
    $region2: #{tpu_custom_call.1} parent=1 // pred_check
      _
    $region3: #{tpu_custom_call.1} parent=1 // pred_check_branch
      %9 = sbr.rel (0) target = $region5
    $region4: #{tpu_custom_call.1} parent=1 // pred_region
      %11 = vsyncadd [#allocation3], 0
      %s13 = sshll.u32 %s0, 4
      %s14 = int_to_ptr.hbm [resolvable:$true] %s13
      %s15 = sshll.u32 [#allocation2], 4
      %s16 = int_to_ptr.vmem [resolvable:$true] %s15
      %18 = dma.hbm_to_vmem [thread:$0]  %s14, 256, %s16, [#allocation3]
    $region5: #{tpu_custom_call.1} parent=1 // pred_fallthru
      _
    // Predicated region
    $region6: #{tpu_custom_call.1} parent=1 // pred_check
      _
    $region7: #{tpu_custom_call.1} parent=1 // pred_check_branch
      %20 = sbr.rel (0) target = $region9
    $region8: #{tpu_custom_call.1} parent=1 // pred_region
      %22 = dma.done [#allocation3], 256
    $region9: #{tpu_custom_call.1} parent=1 // pred_fallthru
      _
    %v23 = vld [vmem:[#allocation2] sm:$0xff]
    %v24 = vld [vmem:[#allocation2 + $0x8] sm:$0xff]
    %25 = vrot.lane.b32.xlu0 %v23, 5
    %v26 = vpop.permute.xlu0 %25
    %27 = vrot.lane.b32.xlu0 %v24, 5
    %v28 = vpop.permute.xlu0 %27
    %v29 = vlaneseq
    %v30 = vand.u32 %v29, 127
    %vm31 = vcmp.lt.s32.totalorder %v30, 5
    %v32 = vsel %vm31, %v26, %v28
    %v33 = vsel %vm31, %v28, %v26
    %34 = vst [vmem:[#allocation5] sm:$0xff] %v33
    %35 = vst [vmem:[#allocation5 + $0x8] sm:$0xff] %v32
    // Predicated region
    $region10: #{tpu_custom_call.1} parent=1 // pred_check
      _
    $region11: #{tpu_custom_call.1} parent=1 // pred_check_branch
      %37 = sbr.rel (0) target = $region13
    $region12: #{tpu_custom_call.1} parent=1 // pred_region
      %39 = vsyncadd [#allocation4], 0
      %s41 = sshll.u32 [#allocation5], 4
      %s42 = int_to_ptr.vmem [resolvable:$true] %s41
      %s43 = sshll.u32 %s1, 4
      %s44 = int_to_ptr.hbm [resolvable:$true] %s43
      %46 = dma.vmem_to_hbm [thread:$0]  %s42, 256, %s44, [#allocation4]
    $region13: #{tpu_custom_call.1} parent=1 // pred_fallthru
      _
    // Predicated region
    $region14: #{tpu_custom_call.1} parent=1 // pred_check
      _
    $region15: #{tpu_custom_call.1} parent=1 // pred_check_branch
      %48 = sbr.rel (0) target = $region17
    $region16: #{tpu_custom_call.1} parent=1 // pred_region
      %50 = dma.done [#allocation4], 256
    $region17: #{tpu_custom_call.1} parent=1 // pred_fallthru
      _
    %51 = vsyncpa [#allocation3], 1
    %52 = vsyncpa [#allocation4], 1

</llo_original>
